<compile_context>
chip_gen: v6e
topology: v6e:2x2x1
jax: 0.10.0
libtpu: 0.0.40
codegen_flags: <defaults>
</compile_context>

<pallas_src>
import math

import jax
import jax.numpy as jnp
from jax.experimental import pallas as pl
from jax.experimental.pallas import tpu as pltpu


def _mlp_pool_kernel(seg_ref, x_ref, emb_w_ref, emb_b_ref, mlp_w_ref,
                     scale_ref, o_ref, acc_ref):
    t = pl.program_id(1)              # node-tile index within this split

    @pl.when(t == 0)
    def _init():
        acc_ref[...] = jnp.zeros_like(acc_ref)

    # Embedding matmul on the MXU (bf16 inputs, f32 accumulation) + bias + ReLU.
    x_emb = jnp.dot(x_ref[...], emb_w_ref[...],
                    preferred_element_type=jnp.float32)
    x_emb = jnp.maximum(x_emb + emb_b_ref[...], 0.0)          # (tile_n, d_in) f32

    # Segment-sum pooling for this node tile: build a tiny (g_p, tile_n) 0/1
    # matrix from the int32 segment ids (padded nodes carry id -1 and match
    # nothing) and reduce into the resident f32 accumulator.  The dot runs in
    # bf16 (exact 0/1 one-hot, f32 accumulation -> native MXU rate).
    seg = seg_ref[...]                                        # (1, tile_n) int32
    g_p = acc_ref.shape[0]
    tile_n = seg.shape[1]
    graph_ids = jax.lax.broadcasted_iota(jnp.int32, (g_p, tile_n), 0)
    onehot = (graph_ids == seg).astype(jnp.bfloat16)          # (g_p, tile_n)
    acc_ref[...] += jnp.dot(onehot, x_emb.astype(jnp.bfloat16),
                            preferred_element_type=jnp.float32)

    # NOTE: when this split has a single tile, init/accumulate/finalize all run
    # on the same step; they are traced in this order -- do not reorder.
    @pl.when(t == pl.num_programs(1) - 1)
    def _finalize():
        pooled = acc_ref[...] * scale_ref[...]                # sum or mean scale
        out = jnp.dot(pooled, mlp_w_ref[...],                 # f32 x f32, tiny
                      preferred_element_type=jnp.float32)
        o_ref[...] = out[None, :, :].astype(o_ref.dtype)      # (1, g_p, d_out_p)


def _round_up(v, m):
    return pl.cdiv(v, m) * m


def mlp_forward(x, batch, emb_weight, emb_bias, mlp_weight, mlp_bias,
                num_graphs, aggr="sum", tile_n=1024, num_splits=2):
    """x: (N, D_in) float32, batch: (N,) int32 graph ids in [0, num_graphs)."""
    n_nodes, d_in = x.shape
    d_out = mlp_weight.shape[1]

    d_out_p = _round_up(d_out, 128)        # lane-dense output stores
    g_p = _round_up(num_graphs, 8)         # sublane-pad graphs

    # Small-N guard: never pad nodes beyond one 16-row-aligned tile.
    tile_n = min(tile_n, _round_up(n_nodes, 16))
    num_tiles_raw = pl.cdiv(n_nodes, tile_n)
    num_splits = max(1, min(num_splits, num_tiles_raw))
    n_p = _round_up(n_nodes, tile_n * num_splits)
    tiles_per_split = n_p // (tile_n * num_splits)
    if n_p > tile_n:
        # The streamed (1, tile_n) segment-id tile must be lane-aligned when it
        # is not the full array extent.
        assert tile_n % 128 == 0, "tile_n must be a multiple of 128 when tiling"

    # Pad + cast inputs. Padded nodes get zero features and segment id -1 so
    # they never contribute; the padded output columns of mlp_weight are zero.
    pad_n = n_p - n_nodes
    x_p = jnp.pad(x.astype(jnp.bfloat16), ((0, pad_n), (0, 0)))
    seg_p = jnp.pad(batch.astype(jnp.int32), (0, pad_n),
                    constant_values=-1)[None, :]
    emb_w_b = emb_weight.astype(jnp.bfloat16)                       # (d_in, d_in)
    emb_b_r = emb_bias.astype(jnp.float32).reshape(1, d_in)
    mlp_w_p = jnp.pad(mlp_weight.astype(jnp.float32),
                      ((0, 0), (0, d_out_p - d_out)))               # resident f32

    if aggr == "sum":
        scale = jnp.ones((g_p, 1), jnp.float32)
    elif aggr == "mean":
        counts = jnp.zeros((num_graphs,), jnp.float32).at[batch].add(1.0)
        inv = 1.0 / jnp.maximum(counts, 1.0)     # exact, computed once in glue
        scale = jnp.zeros((g_p, 1), jnp.float32).at[:num_graphs, 0].set(inv)
    else:
        # TODO(synk): aggr='max' (segment max) not implemented in the kernel.
        raise NotImplementedError("only 'sum' and 'mean' aggr implemented")

    partial = pl.pallas_call(
        _mlp_pool_kernel,
        out_shape=jax.ShapeDtypeStruct((num_splits, g_p, d_out_p), jnp.float32),
        grid=(num_splits, tiles_per_split),
        in_specs=[
            # segment ids (streamed with x)
            pl.BlockSpec((1, tile_n), lambda s, t: (0, s * tiles_per_split + t)),
            # x, streamed unpadded in the feature dim (dominant HBM traffic)
            pl.BlockSpec((tile_n, d_in), lambda s, t: (s * tiles_per_split + t, 0)),
            pl.BlockSpec((d_in, d_in), lambda s, t: (0, 0)),     # emb_weight
            pl.BlockSpec((1, d_in), lambda s, t: (0, 0)),        # emb_bias
            pl.BlockSpec((d_in, d_out_p), lambda s, t: (0, 0)),  # mlp_weight (f32)
            pl.BlockSpec((g_p, 1), lambda s, t: (0, 0)),         # pooling scale
        ],
        out_specs=pl.BlockSpec((1, g_p, d_out_p), lambda s, t: (s, 0, 0)),
        scratch_shapes=[pltpu.VMEM((g_p, d_in), jnp.float32)],
        compiler_params=pltpu.CompilerParams(
            # Leading split axis can be sharded across TensorCores (v7x); the
            # inner node-tile axis carries the accumulator -> "arbitrary".
            dimension_semantics=("parallel", "arbitrary"),
        ),
    )(seg_p, x_p, emb_w_b, emb_b_r, mlp_w_p, scale)

    # Combine per-split partials (linear) and add the bias exactly once.
    out = partial.sum(axis=0)[:num_graphs, :d_out] + mlp_bias
    return out


def _reference(x, batch, emb_weight, emb_bias, mlp_weight, mlp_bias,
               num_graphs, aggr):
    """Pure-JAX reference matching the kernel's precision path."""
    xb = x.astype(jnp.bfloat16).astype(jnp.float32)
    ewb = emb_weight.astype(jnp.bfloat16).astype(jnp.float32)
    x_emb = jax.nn.relu(xb @ ewb + emb_bias)
    x_emb = x_emb.astype(jnp.bfloat16).astype(jnp.float32)   # bf16 pooling operand
    pooled = jnp.zeros((num_graphs, x.shape[1]), jnp.float32).at[batch].add(x_emb)
    if aggr == "mean":
        counts = jnp.zeros((num_graphs,), jnp.float32).at[batch].add(1.0)
        pooled = pooled / jnp.maximum(counts, 1.0)[:, None]
    return pooled @ mlp_weight + mlp_bias


def _glorot(key, shape):
    fan_in, fan_out = shape
    limit = math.sqrt(6.0 / (fan_in + fan_out))
    return jax.random.uniform(key, shape, jnp.float32, -limit, limit)


if __name__ == "__main__":
    input_dim, output_dim = 32, 8
    num_nodes, num_graphs = 16, 2

    key = jax.random.PRNGKey(0)
    k_x, k_emb, k_mlp, k_x2 = jax.random.split(key, 4)

    x = jax.random.normal(k_x, (num_nodes, input_dim), jnp.float32)
    batch = jnp.array([0] * 8 + [1] * 8, dtype=jnp.int32)

    # Deterministic parameter init matching reset_parameters (glorot / zeros).
    emb_weight = _glorot(k_emb, (input_dim, input_dim))
    emb_bias = jnp.zeros((input_dim,), jnp.float32)
    mlp_weight = _glorot(k_mlp, (input_dim, output_dim))
    mlp_bias = jnp.zeros((output_dim,), jnp.float32)

    # --- small demo size (single tile, single split) ---
    out_sum = jax.block_until_ready(
        mlp_forward(x, batch, emb_weight, emb_bias, mlp_weight, mlp_bias,
                    num_graphs=num_graphs, aggr="sum"))
    out_mean = jax.block_until_ready(
        mlp_forward(x, batch, emb_weight, emb_bias, mlp_weight, mlp_bias,
                    num_graphs=num_graphs, aggr="mean"))

    ref_sum = _reference(x, batch, emb_weight, emb_bias, mlp_weight, mlp_bias,
                         num_graphs, "sum")
    ref_mean = _reference(x, batch, emb_weight, emb_bias, mlp_weight, mlp_bias,
                          num_graphs, "mean")

    assert out_sum.shape == (num_graphs, output_dim)
    assert jnp.allclose(out_sum, ref_sum, atol=2e-3, rtol=2e-3)
    assert jnp.allclose(out_mean, ref_mean, atol=2e-3, rtol=2e-3)

    # --- multi-tile / multi-split path (exercises padding, grid and megacore
    #     split logic; still small) ---
    n2, g2 = 320, 4
    x2 = jax.random.normal(k_x2, (n2, input_dim), jnp.float32)
    batch2 = jnp.repeat(jnp.arange(g2, dtype=jnp.int32), n2 // g2)
    out2 = jax.block_until_ready(
        mlp_forward(x2, batch2, emb_weight, emb_bias, mlp_weight, mlp_bias,
                    num_graphs=g2, aggr="sum", tile_n=128, num_splits=2))
    ref2 = _reference(x2, batch2, emb_weight, emb_bias, mlp_weight, mlp_bias,
                      g2, "sum")
    assert out2.shape == (g2, output_dim)
    assert jnp.allclose(out2, ref2, atol=2e-3, rtol=2e-3)

    print("KERNEL_OK")
</pallas_src>

<mosaic_0001>
module attributes {stable_mosaic.version = 11 : i64} {
  func.func @_mlp_pool_kernel(%arg0: i32, %arg1: i32, %arg2: memref<1x16xi32, #tpu.memory_space<vmem>>, %arg3: memref<16x32xbf16, #tpu.memory_space<vmem>>, %arg4: memref<32x32xbf16, #tpu.memory_space<vmem>>, %arg5: memref<1x32xf32, #tpu.memory_space<vmem>>, %arg6: memref<32x128xf32, #tpu.memory_space<vmem>>, %arg7: memref<8x1xf32, #tpu.memory_space<vmem>>, %arg8: memref<1x8x128xf32, #tpu.memory_space<vmem>>, %arg9: memref<8x32xf32, #tpu.memory_space<vmem>>) attributes {dimension_semantics = [#tpu.dimension_semantics<parallel>, #tpu.dimension_semantics<arbitrary>], iteration_bounds = array<i64: 1, 1>, scalar_prefetch = 0 : i64, scratch_operands = 1 : i64, tpu.core_type = #tpu.core_type<tc>, window_params = [{transform_indices = @transform_0, window_bounds = array<i64: 1, 16>}, {transform_indices = @transform_1, window_bounds = array<i64: 16, 32>}, {pipeline_mode = #tpu.pipeline_mode<synchronous>, transform_indices = @transform_2, window_bounds = array<i64: 32, 32>}, {pipeline_mode = #tpu.pipeline_mode<synchronous>, transform_indices = @transform_3, window_bounds = array<i64: 1, 32>}, {pipeline_mode = #tpu.pipeline_mode<synchronous>, transform_indices = @transform_4, window_bounds = array<i64: 32, 128>}, {pipeline_mode = #tpu.pipeline_mode<synchronous>, transform_indices = @transform_5, window_bounds = array<i64: 8, 1>}, {transform_indices = @transform_6, window_bounds = array<i64: 1, 8, 128>}]} {
    %c0_i32 = arith.constant 0 : i32
    %0 = arith.cmpi eq, %arg1, %c0_i32 : i32
    %1 = arith.extui %0 : i1 to i32
    %c0_i32_0 = arith.constant 0 : i32
    %2 = arith.cmpi ne, %1, %c0_i32_0 : i32
    scf.if %2 {
      %cst_16 = arith.constant 0.000000e+00 : f32
      %26 = vector.broadcast %cst_16 : f32 to vector<8x32xf32>
      %c0_17 = arith.constant 0 : index
      %c0_18 = arith.constant 0 : index
      %27 = vector.load %arg9[%c0_17, %c0_18] : memref<8x32xf32, #tpu.memory_space<vmem>>, vector<8x32xf32>
      tpu.vector_store %arg9[%c0_17, %c0_18], %26 {strides = array<i32>} : memref<8x32xf32, #tpu.memory_space<vmem>>, vector<8x32xf32>,
    } else {
    }
    %c0 = arith.constant 0 : index
    %c0_1 = arith.constant 0 : index
    %3 = vector.load %arg3[%c0, %c0_1] : memref<16x32xbf16, #tpu.memory_space<vmem>>, vector<16x32xbf16>
    %c0_2 = arith.constant 0 : index
    %c0_3 = arith.constant 0 : index
    %4 = vector.load %arg4[%c0_2, %c0_3] : memref<32x32xbf16, #tpu.memory_space<vmem>>, vector<32x32xbf16>
    %cst = arith.constant dense<0.000000e+00> : vector<16x32xf32>
    %5 = tpu.matmul %3, %4, %cst {dimension_numbers = #tpu.dot_dimension_numbers<[1], [0], [0], [1], [0, 0, 1, 1], [], []>} : vector<16x32xbf16>, vector<32x32xbf16>, vector<16x32xf32> -> vector<16x32xf32>
    %c0_4 = arith.constant 0 : index
    %c0_5 = arith.constant 0 : index
    %6 = vector.load %arg5[%c0_4, %c0_5] : memref<1x32xf32, #tpu.memory_space<vmem>>, vector<1x32xf32>
    %7 = vector.broadcast %6 : vector<1x32xf32> to vector<16x32xf32>
    %8 = arith.addf %5, %7 : vector<16x32xf32>
    %cst_6 = arith.constant 0.000000e+00 : f32
    %9 = vector.broadcast %cst_6 : f32 to vector<16x32xf32>
    %10 = arith.maximumf %8, %9 : vector<16x32xf32>
    %c0_7 = arith.constant 0 : index
    %c0_8 = arith.constant 0 : index
    %11 = vector.load %arg2[%c0_7, %c0_8] : memref<1x16xi32, #tpu.memory_space<vmem>>, vector<1x16xi32>
    %12 = tpu.iota {dimensions = array<i32: 0>} : vector<8x16xi32>
    %13 = vector.broadcast %11 : vector<1x16xi32> to vector<8x16xi32>
    %14 = arith.cmpi eq, %12, %13 : vector<8x16xi32>
    %15 = arith.extui %14 : vector<8x16xi1> to vector<8x16xi32>
    %16 = arith.sitofp %15 : vector<8x16xi32> to vector<8x16xf32>
    %17 = arith.truncf %16 : vector<8x16xf32> to vector<8x16xbf16>
    %c0_9 = arith.constant 0 : index
    %c0_10 = arith.constant 0 : index
    %18 = vector.load %arg9[%c0_9, %c0_10] : memref<8x32xf32, #tpu.memory_space<vmem>>, vector<8x32xf32>
    %19 = arith.truncf %10 : vector<16x32xf32> to vector<16x32xbf16>
    %cst_11 = arith.constant dense<0.000000e+00> : vector<8x32xf32>
    %20 = tpu.matmul %17, %19, %cst_11 {dimension_numbers = #tpu.dot_dimension_numbers<[1], [0], [0], [1], [0, 0, 1, 1], [], []>} : vector<8x16xbf16>, vector<16x32xbf16>, vector<8x32xf32> -> vector<8x32xf32>
    %21 = arith.addf %18, %20 : vector<8x32xf32>
    %c0_12 = arith.constant 0 : index
    %c0_13 = arith.constant 0 : index
    %22 = vector.load %arg9[%c0_12, %c0_13] : memref<8x32xf32, #tpu.memory_space<vmem>>, vector<8x32xf32>
    tpu.vector_store %arg9[%c0_12, %c0_13], %21 {strides = array<i32>} : memref<8x32xf32, #tpu.memory_space<vmem>>, vector<8x32xf32>,
    %c0_i32_14 = arith.constant 0 : i32
    %23 = arith.cmpi eq, %arg1, %c0_i32_14 : i32
    %24 = arith.extui %23 : i1 to i32
    %c0_i32_15 = arith.constant 0 : i32
    %25 = arith.cmpi ne, %24, %c0_i32_15 : i32
    scf.if %25 {
      %c0_16 = arith.constant 0 : index
      %c0_17 = arith.constant 0 : index
      %26 = vector.load %arg9[%c0_16, %c0_17] : memref<8x32xf32, #tpu.memory_space<vmem>>, vector<8x32xf32>
      %c0_18 = arith.constant 0 : index
      %c0_19 = arith.constant 0 : index
      %27 = vector.load %arg7[%c0_18, %c0_19] : memref<8x1xf32, #tpu.memory_space<vmem>>, vector<8x1xf32>
      %28 = vector.broadcast %27 : vector<8x1xf32> to vector<8x32xf32>
      %29 = arith.mulf %26, %28 : vector<8x32xf32>
      %c0_20 = arith.constant 0 : index
      %c0_21 = arith.constant 0 : index
      %30 = vector.load %arg6[%c0_20, %c0_21] : memref<32x128xf32, #tpu.memory_space<vmem>>, vector<32x128xf32>
      %cst_22 = arith.constant dense<0.000000e+00> : vector<8x128xf32>
      %31 = tpu.matmul %29, %30, %cst_22 {dimension_numbers = #tpu.dot_dimension_numbers<[1], [0], [0], [1], [0, 0, 1, 1], [], []>} : vector<8x32xf32>, vector<32x128xf32>, vector<8x128xf32> -> vector<8x128xf32>
      %32 = vector.shape_cast %31 : vector<8x128xf32> to vector<1x8x128xf32>
      %c0_23 = arith.constant 0 : index
      %c0_24 = arith.constant 0 : index
      %c0_25 = arith.constant 0 : index
      %33 = vector.load %arg8[%c0_23, %c0_24, %c0_25] : memref<1x8x128xf32, #tpu.memory_space<vmem>>, vector<1x8x128xf32>
      tpu.vector_store %arg8[%c0_23, %c0_24, %c0_25], %32 {strides = array<i32>} : memref<1x8x128xf32, #tpu.memory_space<vmem>>, vector<1x8x128xf32>,
    } else {
    }
    return
  }
  func.func @transform_0(%arg0: i32, %arg1: i32) -> (i32, i32) {
    %c1_i32 = arith.constant 1 : i32
    %0 = arith.muli %arg0, %c1_i32 : i32
    %1 = arith.addi %0, %arg1 : i32
    %c0_i32 = arith.constant 0 : i32
    %c0_i32_0 = arith.constant 0 : i32
    return %c0_i32, %1 : i32, i32
  }
  func.func @transform_1(%arg0: i32, %arg1: i32) -> (i32, i32) {
    %c1_i32 = arith.constant 1 : i32
    %0 = arith.muli %arg0, %c1_i32 : i32
    %1 = arith.addi %0, %arg1 : i32
    %c0_i32 = arith.constant 0 : i32
    %c0_i32_0 = arith.constant 0 : i32
    return %1, %c0_i32 : i32, i32
  }
  func.func @transform_2(%arg0: i32, %arg1: i32) -> (i32, i32) {
    %c0_i32 = arith.constant 0 : i32
    %c0_i32_0 = arith.constant 0 : i32
    %c0_i32_1 = arith.constant 0 : i32
    return %c0_i32, %c0_i32_0 : i32, i32
  }
  func.func @transform_3(%arg0: i32, %arg1: i32) -> (i32, i32) {
    %c0_i32 = arith.constant 0 : i32
    %c0_i32_0 = arith.constant 0 : i32
    %c0_i32_1 = arith.constant 0 : i32
    return %c0_i32, %c0_i32_0 : i32, i32
  }
  func.func @transform_4(%arg0: i32, %arg1: i32) -> (i32, i32) {
    %c0_i32 = arith.constant 0 : i32
    %c0_i32_0 = arith.constant 0 : i32
    %c0_i32_1 = arith.constant 0 : i32
    return %c0_i32, %c0_i32_0 : i32, i32
  }
  func.func @transform_5(%arg0: i32, %arg1: i32) -> (i32, i32) {
    %c0_i32 = arith.constant 0 : i32
    %c0_i32_0 = arith.constant 0 : i32
    %c0_i32_1 = arith.constant 0 : i32
    return %c0_i32, %c0_i32_0 : i32, i32
  }
  func.func @transform_6(%arg0: i32, %arg1: i32) -> (i32, i32, i32) {
    %c0_i32 = arith.constant 0 : i32
    %c0_i32_0 = arith.constant 0 : i32
    %c0_i32_1 = arith.constant 0 : i32
    return %arg0, %c0_i32, %c0_i32_0 : i32, i32, i32
  }
}

</mosaic_0001>

<llo_original>
// kernel: tpu_custom_call.1
$region0: #{tpu_custom_call.1}
  #allocation0 [shape = 'u32[]', space=smem, size = 0x4, offset = 0x4, fixed_abs, tag = 'smem constant byte address 0x4 - core index']
  #allocation1 [shape = 'u32[144,128]{1,0:T(1,128)}', space=vmem, size = 0x12000, scoped, tag = 'internal scratch']
  #allocation2 [shape = 'f32[8,32]{1,0:T(8,128)}', space=vmem, size = 0x1000, scoped, tag = 'scratch operand']
  %s0 = inlined_call_operand.vmem [shape: s32[1,16], index: 0, kind: input, shape index: {}]
  %s1 = inlined_call_operand.vmem [shape: bf16[16,32], index: 1, kind: input, shape index: {}]
  %s2 = inlined_call_operand.hbm [shape: bf16[32,32], index: 2, kind: input, shape index: {}]
  %s3 = inlined_call_operand.vmem [shape: f32[1,32], index: 3, kind: input, shape index: {}]
  %s4 = inlined_call_operand.hbm [shape: f32[32,128], index: 4, kind: input, shape index: {}]
  %s5 = inlined_call_operand.vmem [shape: f32[8,1], index: 5, kind: input, shape index: {}]
  %s6 = inlined_call_operand.hbm [shape: f32[1,8,128], index: 6, kind: output, shape index: {}]
  %s7 = sld [smem:[#allocation0]]
  $region50: #{tpu_custom_call.1} parent=0
    _
  %s9 = ssub.s32 1, %s7
  %s10 = scalar_select 0, %s9, %s7
  $region1: #{tpu_custom_call.1} parent=0
    #allocation3 [shape = 'u8[8192]{0}', space=vmem, size = 0x2000, scoped, tag = 'input window, operand 2, single buffered']
    #allocation4 [shape = 's32[1]{0}', space=sflag, size = 0x4, scoped, tag = 'scoped memory for tpu_custom_call.1']
    #allocation5 [shape = 's32[1]{0}', space=sflag, size = 0x4, scoped, tag = 'scoped memory for tpu_custom_call.1']
    #allocation6 [shape = 'u8[16384]{0}', space=vmem, size = 0x4000, scoped, tag = 'input window, operand 4, single buffered']
    #allocation7 [shape = 's32[1]{0}', space=sflag, size = 0x4, scoped, tag = 'scoped memory for tpu_custom_call.1']
    #allocation8 [shape = 'u8[4096]{0}', space=vmem, size = 0x1000, scoped, tag = 'output window, operand 0, single buffered']
    %11 = vsyncpa [#allocation4], 0
    %12 = vsyncpa [#allocation7], 0
    %13 = vsyncpa [#allocation5], 0
    // Predicated region
    $region2: #{tpu_custom_call.1} parent=1 // pred_check
      _
    $region3: #{tpu_custom_call.1} parent=1 // pred_check_branch
      %15 = sbr.rel (0) target = $region5
    $region4: #{tpu_custom_call.1} parent=1 // pred_region
      %s16 = sadd.s32 0, 0
      %p17 = scmp.lt.s32.totalorder %s16, 0
      %s18 = scalar_select %p17, %s16, 0
      %s19 = scalar_lea.vmem %s0, %s18
      %s20 = sadd.s32 0, 0
    $region5: #{tpu_custom_call.1} parent=1 // pred_fallthru
      _
    // Predicated region
    $region6: #{tpu_custom_call.1} parent=1 // pred_check
      _
    $region7: #{tpu_custom_call.1} parent=1 // pred_check_branch
      %22 = sbr.rel (0) target = $region9
    $region8: #{tpu_custom_call.1} parent=1 // pred_region
      %s23 = sadd.s32 0, 0
      %s24 = smul.u32 2, %s23
      %p25 = scmp.lt.s32.totalorder %s24, 1
      %s26 = scalar_select %p25, %s24, 1
      %s27 = smul.addr %s26, 4
      %s28 = scalar_lea.vmem %s1, %s27
      %s29 = sadd.s32 0, 0
      %s30 = smul.u32 2, %s29
    $region9: #{tpu_custom_call.1} parent=1 // pred_fallthru
      _
    // Predicated region
    $region10: #{tpu_custom_call.1} parent=1 // pred_check
      _
    $region11: #{tpu_custom_call.1} parent=1 // pred_check_branch
      %32 = sbr.rel (0) target = $region13
    $region12: #{tpu_custom_call.1} parent=1 // pred_region
      %s34 = ssub.s32 256, 256
      %35 = vsyncadd [#allocation4], %s34
      %s36 = sshll.u32 [#allocation3], 4
      %s37 = int_to_ptr.vmem [resolvable:$true] %s36
      %42 = dma.hbm_to_vmem [thread:$0]  %s2, 256, %s37, [#allocation4], 64, 64, 4
    $region13: #{tpu_custom_call.1} parent=1 // pred_fallthru
      _
    // Predicated region
    $region14: #{tpu_custom_call.1} parent=1 // pred_check
      _
    $region15: #{tpu_custom_call.1} parent=1 // pred_check_branch
      %44 = sbr.rel (0) target = $region17
    $region16: #{tpu_custom_call.1} parent=1 // pred_region
      _
    $region17: #{tpu_custom_call.1} parent=1 // pred_fallthru
      _
    // Predicated region
    $region18: #{tpu_custom_call.1} parent=1 // pred_check
      _
    $region19: #{tpu_custom_call.1} parent=1 // pred_check_branch
      %46 = sbr.rel (0) target = $region21
    $region20: #{tpu_custom_call.1} parent=1 // pred_region
      %s48 = ssub.s32 512, 512
      %49 = vsyncadd [#allocation7], %s48
      %s50 = sshll.u32 [#allocation6], 4
      %s51 = int_to_ptr.vmem [resolvable:$true] %s50
      %56 = dma.hbm_to_vmem [thread:$0]  %s4, 512, %s51, [#allocation7], 128, 128, 8
    $region21: #{tpu_custom_call.1} parent=1 // pred_fallthru
      _
    // Predicated region
    $region22: #{tpu_custom_call.1} parent=1 // pred_check
      _
    $region23: #{tpu_custom_call.1} parent=1 // pred_check_branch
      %58 = sbr.rel (0) target = $region25
    $region24: #{tpu_custom_call.1} parent=1 // pred_region
      _
    $region25: #{tpu_custom_call.1} parent=1 // pred_fallthru
      _
    // Predicated region
    $region26: #{tpu_custom_call.1} parent=1 // pred_check
      _
    $region27: #{tpu_custom_call.1} parent=1 // pred_check_branch
      %60 = sbr.rel (0) target = $region29
    $region28: #{tpu_custom_call.1} parent=1 // pred_region
      %61 = dma.done [#allocation4], 256
    $region29: #{tpu_custom_call.1} parent=1 // pred_fallthru
      _
    // Predicated region
    $region30: #{tpu_custom_call.1} parent=1 // pred_check
      _
    $region31: #{tpu_custom_call.1} parent=1 // pred_check_branch
      %63 = sbr.rel (0) target = $region33
    $region32: #{tpu_custom_call.1} parent=1 // pred_region
      %64 = dma.done [#allocation7], 512
    $region33: #{tpu_custom_call.1} parent=1 // pred_fallthru
      _
    %s65 = sadd.s32 0, 0
    %p66 = scmp.lt.s32.totalorder %s65, 0
    %s67 = scalar_select %p66, %s65, 0
    %s68 = scalar_lea.vmem %s0, %s67
    %s69 = sadd.s32 0, 0
    %s70 = smul.u32 2, %s69
    %p71 = scmp.lt.s32.totalorder %s70, 1
    %s72 = scalar_select %p71, %s70, 1
    %s73 = smul.addr %s72, 4
    %s74 = scalar_lea.vmem %s1, %s73
    %s75 = sadd.s32 0, 0
    %p76 = scmp.lt.s32.totalorder %s75, 0
    %s77 = scalar_select %p76, %s75, 0
    %s78 = scalar_lea.vmem %s0, %s77
    %s79 = sadd.s32 0, 0
    %s80 = sadd.s32 0, 0
    %s81 = smul.u32 2, %s80
    %p82 = scmp.lt.s32.totalorder %s81, 1
    %s83 = scalar_select %p82, %s81, 1
    %s84 = smul.addr %s83, 4
    %s85 = scalar_lea.vmem %s1, %s84
    %s86 = sadd.s32 0, 0
    %s87 = smul.u32 2, %s86
    %p89 = scmp.eq.s32.totalorder 0, 0
    // Predicated region
    $region34: #{tpu_custom_call.1} parent=1 // pred_check
      %p90 = pneg %p89
    $region35: #{tpu_custom_call.1} parent=1 // pred_check_branch
      %92 = sbr.rel (%p90) target = $region37
    $region36: #{tpu_custom_call.1} parent=1 // pred_region
      %vm93 = vcmask 261120
      %94 = vst.msk [vmem:[#allocation2] sm:$0xff] %vm93, 0.0
    $region37: #{tpu_custom_call.1} parent=1 // pred_fallthru
      _
    %v95 = vld [vmem:[%s85] sm:$0xf]
    %v96 = vld [vmem:[%s85 + $0x4] sm:$0xf]
    %v97 = vld [vmem:[#allocation3] sm:$0xf]
    %v98 = vld [vmem:[#allocation3 + $0x4] sm:$0xf]
    %v99 = vld [vmem:[#allocation3 + $0x8] sm:$0xf]
    %v100 = vld [vmem:[#allocation3 + $0xc] sm:$0xf]
    %v101 = vld [vmem:[%s3] sm:$0x1]
    %v103 = vlaneseq
    %v104 = vshrl.u32 %v103, 7
    %v105 = vsub.s32 0, %v104
    %v106 = vrot.slane %v101, %v105
    %v110 = vunpack.c.l.b16 %v95
    %v111 = vunpack.c.l.b16 %v96
    %v112 = vpack.c.b16 %v111, %v110
    %v117 = vunpack.c.l.b16 %v97
    %v118 = vunpack.c.l.b16 %v98
    %v119 = vunpack.c.l.b16 %v99
    %v120 = vunpack.c.l.b16 %v100
    %v121 = vpack.c.b16 %v118, %v117
    %v122 = vpack.c.b16 %v120, %v119
    %vm125 = vcmask 261120
    %v127 = vsel %vm125, %v112, 0
    %129 = vmatprep.subr.bf16.mxu0 0
    %130 = vmatpush1.bf16.msra.mxu0 0
    %131 = vmatprep.subr.bf16.mxu0 0
    %132 = vmatpush1.bf16.msra.mxu0 0
    %133 = vmatprep.subr.bf16.mxu0 0
    %134 = vmatpush1.bf16.msra.mxu0 0
    %135 = vmatprep.subr.bf16.mxu0 0
    %136 = vmatpush1.bf16.msra.mxu0 0
    %137 = vmatprep.subr.bf16.mxu0 0
    %138 = vmatpush1.bf16.msra.mxu0 0
    %139 = vmatprep.subr.bf16.mxu0 0
    %140 = vmatpush1.bf16.msra.mxu0 0
    %141 = vmatprep.subr.bf16.mxu0 0
    %142 = vmatpush1.bf16.msra.mxu0 %v122
    %143 = vmatprep.subr.bf16.mxu0 0
    %144 = vmatpush1.bf16.msra.mxu0 %v121
    %145 = vmatprep.subr.bf16.mxu0 0
    %146 = vmatpush2.bf16.msra.mxu0 0
    %147 = vmatprep.subr.bf16.mxu0 0
    %148 = vmatpush2.bf16.msra.mxu0 0
    %149 = vmatprep.subr.bf16.mxu0 0
    %150 = vmatpush2.bf16.msra.mxu0 0
    %151 = vmatprep.subr.bf16.mxu0 0
    %152 = vmatpush2.bf16.msra.mxu0 0
    %153 = vmatprep.subr.bf16.mxu0 0
    %154 = vmatpush2.bf16.msra.mxu0 0
    %155 = vmatprep.subr.bf16.mxu0 0
    %156 = vmatpush2.bf16.msra.mxu0 0
    %157 = vmatprep.subr.bf16.mxu0 0
    %158 = vmatpush2.bf16.msra.mxu0 0
    %159 = vmatprep.subr.bf16.mxu0 0
    %160 = vmatpush2.bf16.msra.mxu0 0
    %161 = vmatprep.mubr.bf16.mxu0 0
    %162 = vmatmul.mubr.bf16.gmra.mxu0 %v127
    %v163 = vpop.f32.mrf.mxu0
    %v164 = vadd.f32 %v106, %v163
    %v165 = vpop.f32.mrf.mxu0
    %v166 = vpop.f32.mrf.mxu0
    %v167 = vadd.f32 %v106, %v166
    %v168 = vpop.f32.mrf.mxu0
    %169 = vdwg.mxu0
    %v170 = vmax.f32 %v164, 0.0
    %v171 = vmax.f32 %v167, 0.0
    %v172 = vld [vmem:[%s78] sm:$0x1]
    %v173 = vlaneseq
    %v174 = vshrl.u32 %v173, 7
    %v175 = vlaneseq
    %v176 = vshrl.u32 %v175, 7
    %v177 = vsub.s32 0, %v176
    %v178 = vrot.slane %v172, %v177
    %vm179 = vcmp.eq.s32.totalorder %v174, %v178
    %v180 = vsel %vm179, 1, 0
    %v181 = vcvt.s32.f32 %v180
    %v182 = vpack.c.bf16 %v181, %v181
    %v183 = vld [vmem:[#allocation2] sm:$0xff]
    %v184 = vpack.c.bf16 %v171, %v170
    %vm185 = vcmask 130048
    %v187 = vsel %vm185, %v182, 0
    %189 = vmatprep.subr.bf16.mxu0 0
    %190 = vmatpush1.bf16.msra.mxu0 0
    %191 = vmatprep.subr.bf16.mxu0 0
    %192 = vmatpush1.bf16.msra.mxu0 0
    %193 = vmatprep.subr.bf16.mxu0 0
    %194 = vmatpush1.bf16.msra.mxu0 0
    %195 = vmatprep.subr.bf16.mxu0 0
    %196 = vmatpush1.bf16.msra.mxu0 0
    %197 = vmatprep.subr.bf16.mxu0 0
    %198 = vmatpush1.bf16.msra.mxu0 0
    %199 = vmatprep.subr.bf16.mxu0 0
    %200 = vmatpush1.bf16.msra.mxu0 0
    %201 = vmatprep.subr.bf16.mxu0 0
    %202 = vmatpush1.bf16.msra.mxu0 0
    %203 = vmatprep.subr.bf16.mxu0 0
    %204 = vmatpush1.bf16.msra.mxu0 %v184
    %205 = vmatprep.subr.bf16.mxu0 0
    %206 = vmatpush2.bf16.msra.mxu0 0
    %207 = vmatprep.subr.bf16.mxu0 0
    %208 = vmatpush2.bf16.msra.mxu0 0
    %209 = vmatprep.subr.bf16.mxu0 0
    %210 = vmatpush2.bf16.msra.mxu0 0
    %211 = vmatprep.subr.bf16.mxu0 0
    %212 = vmatpush2.bf16.msra.mxu0 0
    %213 = vmatprep.subr.bf16.mxu0 0
    %214 = vmatpush2.bf16.msra.mxu0 0
    %215 = vmatprep.subr.bf16.mxu0 0
    %216 = vmatpush2.bf16.msra.mxu0 0
    %217 = vmatprep.subr.bf16.mxu0 0
    %218 = vmatpush2.bf16.msra.mxu0 0
    %219 = vmatprep.subr.bf16.mxu0 0
    %220 = vmatpush2.bf16.msra.mxu0 0
    %221 = vmatprep.mubr.bf16.mxu0 0
    %222 = vmatmul.mubr.bf16.gmra.mxu0 %v187
    %v223 = vpop.f32.mrf.mxu0
    %v224 = vadd.f32 0.0, %v223
    %v225 = vpop.f32.mrf.mxu0
    %v226 = vpop.f32.mrf.mxu0
    %v227 = vpop.f32.mrf.mxu0
    %228 = vdwg.mxu0
    %v229 = vadd.f32 %v183, %v224
    %230 = vst.msk [vmem:[#allocation2] sm:$0xff] %vm125, %v229
    // Predicated region
    $region38: #{tpu_custom_call.1} parent=1 // pred_check
      %p231 = pneg %p89
    $region39: #{tpu_custom_call.1} parent=1 // pred_check_branch
      %233 = sbr.rel (%p231) target = $region41
    $region40: #{tpu_custom_call.1} parent=1 // pred_region
      %v234 = vld [vmem:[#allocation2] sm:$0xff]
      %v235 = vld [vmem:[%s5] sm:$0xff]
      %237 = vset.pattern.permute.xlu0 0
      %238 = vperm.xlu0 %237, %v235
      %v239 = vpop.permute.xlu0 %238
      %v241 = vmul.f32 %v234, %v239
      %v242 = vld [vmem:[#allocation6] sm:$0xff]
      %v243 = vld [vmem:[#allocation6 + $0x8] sm:$0xff]
      %v244 = vld [vmem:[#allocation6 + $0x10] sm:$0xff]
      %v245 = vld [vmem:[#allocation6 + $0x18] sm:$0xff]
      %v247 = vsel %vm125, %v241, 0
      %249 = vmatprep.subr.mxu0 0.0
      %250 = vmatpush1.msra.mxu0 0.0
      %251 = vmatprep.subr.mxu0 0.0
      %252 = vmatpush1.msra.mxu0 0.0
      %253 = vmatprep.subr.mxu0 0.0
      %254 = vmatpush1.msra.mxu0 0.0
      %255 = vmatprep.subr.mxu0 0.0
      %256 = vmatpush1.msra.mxu0 0.0
      %257 = vmatprep.subr.mxu0 0.0
      %258 = vmatpush1.msra.mxu0 0.0
      %259 = vmatprep.subr.mxu0 0.0
      %260 = vmatpush1.msra.mxu0 0.0
      %261 = vmatprep.subr.mxu0 0.0
      %262 = vmatpush1.msra.mxu0 0.0
      %263 = vmatprep.subr.mxu0 0.0
      %264 = vmatpush1.msra.mxu0 0.0
      %265 = vmatprep.subr.mxu0 0.0
      %266 = vmatpush1.msra.mxu0 0.0
      %267 = vmatprep.subr.mxu0 0.0
      %268 = vmatpush1.msra.mxu0 0.0
      %269 = vmatprep.subr.mxu0 0.0
      %270 = vmatpush1.msra.mxu0 0.0
      %271 = vmatprep.subr.mxu0 0.0
      %272 = vmatpush1.msra.mxu0 0.0
      %273 = vmatprep.subr.mxu0 0.0
      %274 = vmatpush1.msra.mxu0 %v245
      %275 = vmatprep.subr.mxu0 0.0
      %276 = vmatpush1.msra.mxu0 %v244
      %277 = vmatprep.subr.mxu0 0.0
      %278 = vmatpush1.msra.mxu0 %v243
      %279 = vmatprep.subr.mxu0 0.0
      %280 = vmatpush1.msra.mxu0 %v242
      %281 = vmatprep.subr.mxu0 0.0
      %282 = vmatpush2.msra.mxu0 0.0
      %283 = vmatprep.subr.mxu0 0.0
      %284 = vmatpush2.msra.mxu0 0.0
      %285 = vmatprep.subr.mxu0 0.0
      %286 = vmatpush2.msra.mxu0 0.0
      %287 = vmatprep.subr.mxu0 0.0
      %288 = vmatpush2.msra.mxu0 0.0
      %289 = vmatprep.subr.mxu0 0.0
      %290 = vmatpush2.msra.mxu0 0.0
      %291 = vmatprep.subr.mxu0 0.0
      %292 = vmatpush2.msra.mxu0 0.0
      %293 = vmatprep.subr.mxu0 0.0
      %294 = vmatpush2.msra.mxu0 0.0
      %295 = vmatprep.subr.mxu0 0.0
      %296 = vmatpush2.msra.mxu0 0.0
      %297 = vmatprep.subr.mxu0 0.0
      %298 = vmatpush2.msra.mxu0 0.0
      %299 = vmatprep.subr.mxu0 0.0
      %300 = vmatpush2.msra.mxu0 0.0
      %301 = vmatprep.subr.mxu0 0.0
      %302 = vmatpush2.msra.mxu0 0.0
      %303 = vmatprep.subr.mxu0 0.0
      %304 = vmatpush2.msra.mxu0 0.0
      %305 = vmatprep.subr.mxu0 0.0
      %306 = vmatpush2.msra.mxu0 0.0
      %307 = vmatprep.subr.mxu0 0.0
      %308 = vmatpush2.msra.mxu0 0.0
      %309 = vmatprep.subr.mxu0 0.0
      %310 = vmatpush2.msra.mxu0 0.0
      %311 = vmatprep.subr.mxu0 0.0
      %312 = vmatpush2.msra.mxu0 0.0
      %313 = vmatprep.mubr.f32.mxu0 0.0
      %314 = vmatmul.mubr.f32.gmra.mxu0 %v247
      %v315 = vpop.f32.mrf.mxu0
      %v316 = vadd.f32 0.0, %v315
      %v317 = vpop.f32.mrf.mxu0
      %318 = vdwg.mxu0
      %319 = vst [vmem:[#allocation8] sm:$0xff] %v316
    $region41: #{tpu_custom_call.1} parent=1 // pred_fallthru
      _
    // Predicated region
    $region42: #{tpu_custom_call.1} parent=1 // pred_check
      _
    $region43: #{tpu_custom_call.1} parent=1 // pred_check_branch
      %321 = sbr.rel (0) target = $region45
    $region44: #{tpu_custom_call.1} parent=1 // pred_region
      %s323 = ssub.s32 128, 128
      %324 = vsyncadd [#allocation5], %s323
      %s326 = sshll.u32 [#allocation8], 4
      %s327 = int_to_ptr.vmem [resolvable:$true] %s326
      %329 = dma.vmem_to_hbm [thread:$0]  %s327, 128, %s6, [#allocation5]
    $region45: #{tpu_custom_call.1} parent=1 // pred_fallthru
      _
    // Predicated region
    $region46: #{tpu_custom_call.1} parent=1 // pred_check
      _
    $region47: #{tpu_custom_call.1} parent=1 // pred_check_branch
      %331 = sbr.rel (0) target = $region49
    $region48: #{tpu_custom_call.1} parent=1 // pred_region
      %332 = dma.done [#allocation5], 128
    $region49: #{tpu_custom_call.1} parent=1 // pred_fallthru
      _
    %333 = vsyncpa [#allocation4], 1
    %334 = vsyncpa [#allocation7], 1
    %335 = vsyncpa [#allocation5], 1

</llo_original>
